<compile_context>
chip_gen: v6e
topology: v6e:2x2x1
jax: 0.10.0
libtpu: 0.0.40
codegen_flags: <defaults>
</compile_context>

<pallas_src>
import functools

import jax
import jax.numpy as jnp
from jax.experimental import pallas as pl
from jax.experimental.pallas import tpu as pltpu


def _round_up(x, m):
    return ((x + m - 1) // m) * m


def _choose_tile(dim, desired, granularities=(128, 8)):
    """Largest tile <= desired that divides `dim` and is a multiple of a granularity.

    Falls back to the full dimension (always legal for a BlockSpec) if nothing fits.
    """
    if dim <= desired:
        return dim
    for g in granularities:
        t = (desired // g) * g
        while t >= g:
            if dim % t == 0:
                return t
            t -= g
    return dim


def _lora_linear_kernel(x_ref, wt_ref, b_ref, a_ref, l_ref, o_ref,
                        acc_ref, xa_ref, *, compute_dtype):
    """Produces one (tm, tn) output tile, reduced over the innermost K grid axis."""
    k = pl.program_id(2)

    @pl.when(k == 0)
    def _init():
        acc_ref[...] = jnp.zeros_like(acc_ref)
        xa_ref[...] = jnp.zeros_like(xa_ref)

    x = x_ref[...]
    w = wt_ref[...]
    a = a_ref[...]
    if compute_dtype is not None:
        # Optional bf16 MXU operands (v6e/v7x); accumulation stays f32.
        x = x.astype(compute_dtype)
        w = w.astype(compute_dtype)
        a = a.astype(compute_dtype)

    # Base path: accumulate x_tile(tm,tk) @ Wt_tile(tk,tn) in f32 (MXU).
    acc_ref[...] += jnp.dot(x, w, preferred_element_type=jnp.float32)
    # LoRA path stage 1: accumulate x_tile @ A_tile(tk,R_pad) -> tiny (tm,R_pad) f32.
    xa_ref[...] += jnp.dot(x, a, preferred_element_type=jnp.float32)

    @pl.when(k == pl.num_programs(2) - 1)
    def _finalize():
        l = l_ref[...]                       # (R_pad, tn), scale already folded in
        xa = xa_ref[...].astype(l.dtype)
        lora = jnp.dot(xa, l, preferred_element_type=jnp.float32)
        out = acc_ref[...] + lora + b_ref[...].astype(jnp.float32)
        o_ref[...] = out.astype(o_ref.dtype)


def lora_linear(x, weight, bias, lora_right, lora_left, lora_scaling, lora_dim,
                *, tm=256, tn=512, tk=512, compute_dtype=None):
    """x: (B,S,K); weight: (N,K); bias: (N,) or None; lora_right: (K,R); lora_left: (R,N)."""
    B, S, K = x.shape
    N, K_w = weight.shape
    assert K_w == K
    R = lora_right.shape[1]
    M = B * S

    x2d = x.reshape(M, K)
    w_t = weight.T                              # (K, N): MXU-friendly, lane-dense in N
    if bias is None:
        bias = jnp.zeros((N,), dtype=x.dtype)
    bias2d = bias.reshape(1, N)

    # Fold LoRA scale into L once at trace time; pad R to sublane granularity.
    scale = float(lora_scaling) / float(lora_dim)
    r_pad = max(16, _round_up(R, 16))
    a_pad = jnp.zeros((K, r_pad), lora_right.dtype).at[:, :R].set(lora_right)
    l_pad = jnp.zeros((r_pad, N), lora_left.dtype).at[:R, :].set(lora_left * scale)

    # Tile sizes: (8,128)-compatible, full-extent fallback for small/odd dims.
    tm = _choose_tile(M, tm, (128, 8))
    tn = _choose_tile(N, tn, (128,))
    tk = _choose_tile(K, tk, (128,))
    grid = (M // tm, N // tn, K // tk)

    kernel = functools.partial(_lora_linear_kernel, compute_dtype=compute_dtype)

    def _isz(a):
        return jnp.dtype(a.dtype).itemsize

    # Rough double-buffered VMEM footprint -> explicit scoped limit with headroom
    # (kept conservative so the same plan also fits v7x's 64 MiB VMEM).
    vmem_need = 2 * (tm * tk * _isz(x2d) + tk * tn * _isz(w_t) + tn * _isz(bias2d)
                     + tk * r_pad * _isz(a_pad) + r_pad * tn * _isz(l_pad)
                     + tm * tn * _isz(x))
    vmem_need += 4 * (tm * tn + tm * r_pad)     # f32 scratch accumulators
    vmem_limit = int(min(max(2 * vmem_need, 16 << 20), 48 << 20))

    cost = pl.CostEstimate(
        flops=2 * M * N * K + 2 * M * K * r_pad + 2 * M * r_pad * N,
        transcendentals=0,
        bytes_accessed=(x2d.size * _isz(x2d) + w_t.size * _isz(w_t)
                        + a_pad.size * _isz(a_pad) + l_pad.size * _isz(l_pad)
                        + bias2d.size * _isz(bias2d) + M * N * _isz(x)),
    )

    out2d = pl.pallas_call(
        kernel,
        out_shape=jax.ShapeDtypeStruct((M, N), x.dtype),
        grid_spec=pltpu.PrefetchScalarGridSpec(
            num_scalar_prefetch=0,
            grid=grid,
            in_specs=[
                pl.BlockSpec((tm, tk), lambda i, j, k: (i, k)),       # x
                pl.BlockSpec((tk, tn), lambda i, j, k: (k, j)),       # W^T
                pl.BlockSpec((1, tn), lambda i, j, k: (0, j)),        # bias
                pl.BlockSpec((tk, r_pad), lambda i, j, k: (k, 0)),    # A (padded)
                pl.BlockSpec((r_pad, tn), lambda i, j, k: (0, j)),    # L*scale (padded)
            ],
            out_specs=pl.BlockSpec((tm, tn), lambda i, j, k: (i, j)),
            scratch_shapes=[
                pltpu.VMEM((tm, tn), jnp.float32),    # base-matmul accumulator
                pltpu.VMEM((tm, r_pad), jnp.float32), # x @ A accumulator
            ],
        ),
        compiler_params=pltpu.CompilerParams(
            dimension_semantics=("parallel", "parallel", "arbitrary"),
            vmem_limit_bytes=vmem_limit,
        ),
        cost_estimate=cost,
    )(x2d, w_t, bias2d, a_pad, l_pad)

    return out2d.reshape(B, S, N)


if __name__ == "__main__":
    # Small, deterministic setup.
    B, S = 2, 8           # batch, sequence
    K = 32                # in_features (columns of weight)
    N = 48                # out_features (rows of weight)
    R = 4                 # lora_dim
    lora_scaling = 1.0

    key = jax.random.PRNGKey(0)
    kx, kw, kb, ka, kl = jax.random.split(key, 5)

    x = jax.random.normal(kx, (B, S, K), dtype=jnp.float32)
    weight = jax.random.normal(kw, (N, K), dtype=jnp.float32) * 0.1
    bias = jax.random.normal(kb, (N,), dtype=jnp.float32) * 0.1
    # NOTE: the PyTorch module zero-inits lora_left_weight (so the LoRA term is 0
    # right after init); nonzero values exercise the full LoRA compute path.
    lora_right = jax.random.normal(ka, (K, R), dtype=jnp.float32) * 0.1
    lora_left = jax.random.normal(kl, (R, N), dtype=jnp.float32) * 0.1

    # TODO(synk): lora_dropout with p>0 (stateful RNG) not implemented; the test
    # configuration uses p=0 -> Identity, which is what this kernel computes.
    out = lora_linear(x, weight, bias, lora_right, lora_left, lora_scaling, R)
    out = jax.block_until_ready(out)

    # Pure-JAX reference check.
    ref = (x @ weight.T + bias
           + (x @ lora_right @ lora_left) * (lora_scaling / R))
    assert out.shape == (B, S, N)
    assert jnp.allclose(out, ref, atol=1e-4, rtol=1e-4)

    print("KERNEL_OK")
</pallas_src>

<mosaic_0001>
module attributes {stable_mosaic.version = 11 : i64} {
  func.func @_lora_linear_kernel(%arg0: i32, %arg1: i32, %arg2: i32, %arg3: memref<16x32xf32, #tpu.memory_space<vmem>>, %arg4: memref<32x48xf32, #tpu.memory_space<vmem>>, %arg5: memref<1x48xf32, #tpu.memory_space<vmem>>, %arg6: memref<32x16xf32, #tpu.memory_space<vmem>>, %arg7: memref<16x48xf32, #tpu.memory_space<vmem>>, %arg8: memref<16x48xf32, #tpu.memory_space<vmem>>, %arg9: memref<16x48xf32, #tpu.memory_space<vmem>>, %arg10: memref<16x16xf32, #tpu.memory_space<vmem>>) attributes {dimension_semantics = [#tpu.dimension_semantics<parallel>, #tpu.dimension_semantics<parallel>, #tpu.dimension_semantics<arbitrary>], iteration_bounds = array<i64: 1, 1, 1>, scalar_prefetch = 0 : i64, scratch_operands = 2 : i64, tpu.core_type = #tpu.core_type<tc>, window_params = [{transform_indices = @transform_0, window_bounds = array<i64: 16, 32>}, {transform_indices = @transform_1, window_bounds = array<i64: 32, 48>}, {transform_indices = @transform_2, window_bounds = array<i64: 1, 48>}, {transform_indices = @transform_3, window_bounds = array<i64: 32, 16>}, {transform_indices = @transform_4, window_bounds = array<i64: 16, 48>}, {transform_indices = @transform_5, window_bounds = array<i64: 16, 48>}]} {
    %c0_i32 = arith.constant 0 : i32
    %0 = arith.cmpi eq, %arg2, %c0_i32 : i32
    %1 = arith.extui %0 : i1 to i32
    %c0_i32_0 = arith.constant 0 : i32
    %2 = arith.cmpi ne, %1, %c0_i32_0 : i32
    scf.if %2 {
      %cst_17 = arith.constant 0.000000e+00 : f32
      %17 = vector.broadcast %cst_17 : f32 to vector<16x48xf32>
      %c0_18 = arith.constant 0 : index
      %c0_19 = arith.constant 0 : index
      %18 = vector.load %arg9[%c0_18, %c0_19] : memref<16x48xf32, #tpu.memory_space<vmem>>, vector<16x48xf32>
      tpu.vector_store %arg9[%c0_18, %c0_19], %17 {strides = array<i32>} : memref<16x48xf32, #tpu.memory_space<vmem>>, vector<16x48xf32>,
      %cst_20 = arith.constant 0.000000e+00 : f32
      %19 = vector.broadcast %cst_20 : f32 to vector<16x16xf32>
      %c0_21 = arith.constant 0 : index
      %c0_22 = arith.constant 0 : index
      %20 = vector.load %arg10[%c0_21, %c0_22] : memref<16x16xf32, #tpu.memory_space<vmem>>, vector<16x16xf32>
      tpu.vector_store %arg10[%c0_21, %c0_22], %19 {strides = array<i32>} : memref<16x16xf32, #tpu.memory_space<vmem>>, vector<16x16xf32>,
    } else {
    }
    %c0 = arith.constant 0 : index
    %c0_1 = arith.constant 0 : index
    %3 = vector.load %arg3[%c0, %c0_1] : memref<16x32xf32, #tpu.memory_space<vmem>>, vector<16x32xf32>
    %c0_2 = arith.constant 0 : index
    %c0_3 = arith.constant 0 : index
    %4 = vector.load %arg4[%c0_2, %c0_3] : memref<32x48xf32, #tpu.memory_space<vmem>>, vector<32x48xf32>
    %c0_4 = arith.constant 0 : index
    %c0_5 = arith.constant 0 : index
    %5 = vector.load %arg6[%c0_4, %c0_5] : memref<32x16xf32, #tpu.memory_space<vmem>>, vector<32x16xf32>
    %c0_6 = arith.constant 0 : index
    %c0_7 = arith.constant 0 : index
    %6 = vector.load %arg9[%c0_6, %c0_7] : memref<16x48xf32, #tpu.memory_space<vmem>>, vector<16x48xf32>
    %cst = arith.constant dense<0.000000e+00> : vector<16x48xf32>
    %7 = tpu.matmul %3, %4, %cst {dimension_numbers = #tpu.dot_dimension_numbers<[1], [0], [0], [1], [0, 0, 1, 1], [], []>} : vector<16x32xf32>, vector<32x48xf32>, vector<16x48xf32> -> vector<16x48xf32>
    %8 = arith.addf %6, %7 : vector<16x48xf32>
    %c0_8 = arith.constant 0 : index
    %c0_9 = arith.constant 0 : index
    %9 = vector.load %arg9[%c0_8, %c0_9] : memref<16x48xf32, #tpu.memory_space<vmem>>, vector<16x48xf32>
    tpu.vector_store %arg9[%c0_8, %c0_9], %8 {strides = array<i32>} : memref<16x48xf32, #tpu.memory_space<vmem>>, vector<16x48xf32>,
    %c0_10 = arith.constant 0 : index
    %c0_11 = arith.constant 0 : index
    %10 = vector.load %arg10[%c0_10, %c0_11] : memref<16x16xf32, #tpu.memory_space<vmem>>, vector<16x16xf32>
    %cst_12 = arith.constant dense<0.000000e+00> : vector<16x16xf32>
    %11 = tpu.matmul %3, %5, %cst_12 {dimension_numbers = #tpu.dot_dimension_numbers<[1], [0], [0], [1], [0, 0, 1, 1], [], []>} : vector<16x32xf32>, vector<32x16xf32>, vector<16x16xf32> -> vector<16x16xf32>
    %12 = arith.addf %10, %11 : vector<16x16xf32>
    %c0_13 = arith.constant 0 : index
    %c0_14 = arith.constant 0 : index
    %13 = vector.load %arg10[%c0_13, %c0_14] : memref<16x16xf32, #tpu.memory_space<vmem>>, vector<16x16xf32>
    tpu.vector_store %arg10[%c0_13, %c0_14], %12 {strides = array<i32>} : memref<16x16xf32, #tpu.memory_space<vmem>>, vector<16x16xf32>,
    %c0_i32_15 = arith.constant 0 : i32
    %14 = arith.cmpi eq, %arg2, %c0_i32_15 : i32
    %15 = arith.extui %14 : i1 to i32
    %c0_i32_16 = arith.constant 0 : i32
    %16 = arith.cmpi ne, %15, %c0_i32_16 : i32
    scf.if %16 {
      %c0_17 = arith.constant 0 : index
      %c0_18 = arith.constant 0 : index
      %17 = vector.load %arg7[%c0_17, %c0_18] : memref<16x48xf32, #tpu.memory_space<vmem>>, vector<16x48xf32>
      %c0_19 = arith.constant 0 : index
      %c0_20 = arith.constant 0 : index
      %18 = vector.load %arg10[%c0_19, %c0_20] : memref<16x16xf32, #tpu.memory_space<vmem>>, vector<16x16xf32>
      %cst_21 = arith.constant dense<0.000000e+00> : vector<16x48xf32>
      %19 = tpu.matmul %18, %17, %cst_21 {dimension_numbers = #tpu.dot_dimension_numbers<[1], [0], [0], [1], [0, 0, 1, 1], [], []>} : vector<16x16xf32>, vector<16x48xf32>, vector<16x48xf32> -> vector<16x48xf32>
      %c0_22 = arith.constant 0 : index
      %c0_23 = arith.constant 0 : index
      %20 = vector.load %arg9[%c0_22, %c0_23] : memref<16x48xf32, #tpu.memory_space<vmem>>, vector<16x48xf32>
      %21 = arith.addf %20, %19 : vector<16x48xf32>
      %c0_24 = arith.constant 0 : index
      %c0_25 = arith.constant 0 : index
      %22 = vector.load %arg5[%c0_24, %c0_25] : memref<1x48xf32, #tpu.memory_space<vmem>>, vector<1x48xf32>
      %23 = vector.broadcast %22 : vector<1x48xf32> to vector<16x48xf32>
      %24 = arith.addf %21, %23 : vector<16x48xf32>
      %c0_26 = arith.constant 0 : index
      %c0_27 = arith.constant 0 : index
      %25 = vector.load %arg8[%c0_26, %c0_27] : memref<16x48xf32, #tpu.memory_space<vmem>>, vector<16x48xf32>
      tpu.vector_store %arg8[%c0_26, %c0_27], %24 {strides = array<i32>} : memref<16x48xf32, #tpu.memory_space<vmem>>, vector<16x48xf32>,
    } else {
    }
    return
  }
  func.func @transform_0(%arg0: i32, %arg1: i32, %arg2: i32) -> (i32, i32) {
    %c0_i32 = arith.constant 0 : i32
    return %arg0, %arg2 : i32, i32
  }
  func.func @transform_1(%arg0: i32, %arg1: i32, %arg2: i32) -> (i32, i32) {
    %c0_i32 = arith.constant 0 : i32
    return %arg2, %arg1 : i32, i32
  }
  func.func @transform_2(%arg0: i32, %arg1: i32, %arg2: i32) -> (i32, i32) {
    %c0_i32 = arith.constant 0 : i32
    %c0_i32_0 = arith.constant 0 : i32
    return %c0_i32, %arg1 : i32, i32
  }
  func.func @transform_3(%arg0: i32, %arg1: i32, %arg2: i32) -> (i32, i32) {
    %c0_i32 = arith.constant 0 : i32
    %c0_i32_0 = arith.constant 0 : i32
    return %arg2, %c0_i32 : i32, i32
  }
  func.func @transform_4(%arg0: i32, %arg1: i32, %arg2: i32) -> (i32, i32) {
    %c0_i32 = arith.constant 0 : i32
    %c0_i32_0 = arith.constant 0 : i32
    return %c0_i32, %arg1 : i32, i32
  }
  func.func @transform_5(%arg0: i32, %arg1: i32, %arg2: i32) -> (i32, i32) {
    %c0_i32 = arith.constant 0 : i32
    return %arg0, %arg1 : i32, i32
  }
}

</mosaic_0001>

<llo_original>
// kernel: tpu_custom_call.1
$region0: #{tpu_custom_call.1}
  #allocation0 [shape = 'u32[]', space=smem, size = 0x4, offset = 0x4, fixed_abs, tag = 'smem constant byte address 0x4 - core index']
  #allocation1 [shape = 'u32[144,128]{1,0:T(1,128)}', space=vmem, size = 0x12000, scoped, tag = 'internal scratch']
  #allocation2 [shape = 'f32[16,48]{1,0:T(8,128)}', space=vmem, size = 0x2000, scoped, tag = 'scratch operand']
  #allocation3 [shape = 'f32[16,16]{1,0:T(8,128)}', space=vmem, size = 0x2000, scoped, tag = 'scratch operand']
  %s0 = inlined_call_operand.vmem [shape: f32[16,32], index: 0, kind: input, shape index: {}]
  %s1 = inlined_call_operand.vmem [shape: f32[32,48], index: 1, kind: input, shape index: {}]
  %s2 = inlined_call_operand.vmem [shape: f32[1,48], index: 2, kind: input, shape index: {}]
  %s3 = inlined_call_operand.vmem [shape: f32[32,16], index: 3, kind: input, shape index: {}]
  %s4 = inlined_call_operand.hbm [shape: f32[16,48], index: 4, kind: input, shape index: {}]
  %s5 = inlined_call_operand.hbm [shape: f32[16,48], index: 5, kind: output, shape index: {}]
  %s6 = sld [smem:[#allocation0]]
  $region42: #{tpu_custom_call.1} parent=0
    _
  %s8 = ssub.s32 1, %s6
  %s9 = scalar_select 0, %s8, %s6
  $region1: #{tpu_custom_call.1} parent=0
    #allocation4 [shape = 'u8[8192]{0}', space=vmem, size = 0x2000, scoped, tag = 'input window, operand 4, single buffered']
    #allocation5 [shape = 's32[1]{0}', space=sflag, size = 0x4, scoped, tag = 'scoped memory for tpu_custom_call.1']
    #allocation6 [shape = 's32[1]{0}', space=sflag, size = 0x4, scoped, tag = 'scoped memory for tpu_custom_call.1']
    #allocation7 [shape = 'u8[8192]{0}', space=vmem, size = 0x2000, scoped, tag = 'output window, operand 0, single buffered']
    %10 = vsyncpa [#allocation5], 0
    %11 = vsyncpa [#allocation6], 0
    // Predicated region
    $region2: #{tpu_custom_call.1} parent=1 // pred_check
      _
    $region3: #{tpu_custom_call.1} parent=1 // pred_check_branch
      %13 = sbr.rel (0) target = $region5
    $region4: #{tpu_custom_call.1} parent=1 // pred_region
      _
    $region5: #{tpu_custom_call.1} parent=1 // pred_fallthru
      _
    // Predicated region
    $region6: #{tpu_custom_call.1} parent=1 // pred_check
      _
    $region7: #{tpu_custom_call.1} parent=1 // pred_check_branch
      %15 = sbr.rel (0) target = $region9
    $region8: #{tpu_custom_call.1} parent=1 // pred_region
      _
    $region9: #{tpu_custom_call.1} parent=1 // pred_fallthru
      _
    // Predicated region
    $region10: #{tpu_custom_call.1} parent=1 // pred_check
      _
    $region11: #{tpu_custom_call.1} parent=1 // pred_check_branch
      %17 = sbr.rel (0) target = $region13
    $region12: #{tpu_custom_call.1} parent=1 // pred_region
      _
    $region13: #{tpu_custom_call.1} parent=1 // pred_fallthru
      _
    // Predicated region
    $region14: #{tpu_custom_call.1} parent=1 // pred_check
      _
    $region15: #{tpu_custom_call.1} parent=1 // pred_check_branch
      %19 = sbr.rel (0) target = $region17
    $region16: #{tpu_custom_call.1} parent=1 // pred_region
      _
    $region17: #{tpu_custom_call.1} parent=1 // pred_fallthru
      _
    // Predicated region
    $region18: #{tpu_custom_call.1} parent=1 // pred_check
      _
    $region19: #{tpu_custom_call.1} parent=1 // pred_check_branch
      %21 = sbr.rel (0) target = $region21
    $region20: #{tpu_custom_call.1} parent=1 // pred_region
      %s23 = ssub.s32 256, 256
      %24 = vsyncadd [#allocation5], %s23
      %s25 = sshll.u32 [#allocation4], 4
      %s26 = int_to_ptr.vmem [resolvable:$true] %s25
      %31 = dma.hbm_to_vmem [thread:$0]  %s4, 256, %s26, [#allocation5], 128, 128, 8
    $region21: #{tpu_custom_call.1} parent=1 // pred_fallthru
      _
    // Predicated region
    $region22: #{tpu_custom_call.1} parent=1 // pred_check
      _
    $region23: #{tpu_custom_call.1} parent=1 // pred_check_branch
      %33 = sbr.rel (0) target = $region25
    $region24: #{tpu_custom_call.1} parent=1 // pred_region
      %34 = dma.done [#allocation5], 256
    $region25: #{tpu_custom_call.1} parent=1 // pred_fallthru
      _
    %p35 = scmp.eq.s32.totalorder 0, 0
    // Predicated region
    $region26: #{tpu_custom_call.1} parent=1 // pred_check
      %p36 = pneg %p35
    $region27: #{tpu_custom_call.1} parent=1 // pred_check_branch
      %38 = sbr.rel (%p36) target = $region29
    $region28: #{tpu_custom_call.1} parent=1 // pred_region
      %vm39 = vcmask 392192
      %40 = vst.msk [vmem:[#allocation2] sm:$0xff] %vm39, 0.0
      %41 = vst.msk [vmem:[#allocation2 + $0x8] sm:$0xff] %vm39, 0.0
      %vm42 = vcmask 130048
      %43 = vst.msk [vmem:[#allocation3] sm:$0xff] %vm42, 0.0
      %44 = vst.msk [vmem:[#allocation3 + $0x8] sm:$0xff] %vm42, 0.0
    $region29: #{tpu_custom_call.1} parent=1 // pred_fallthru
      _
    %v45 = vld [vmem:[%s0] sm:$0xff]
    %v46 = vld [vmem:[%s0 + $0x8] sm:$0xff]
    %v47 = vld [vmem:[%s1] sm:$0xff]
    %v48 = vld [vmem:[%s1 + $0x8] sm:$0xff]
    %v49 = vld [vmem:[%s1 + $0x10] sm:$0xff]
    %v50 = vld [vmem:[%s1 + $0x18] sm:$0xff]
    %v51 = vld [vmem:[%s3] sm:$0xff]
    %v52 = vld [vmem:[%s3 + $0x8] sm:$0xff]
    %v53 = vld [vmem:[%s3 + $0x10] sm:$0xff]
    %v54 = vld [vmem:[%s3 + $0x18] sm:$0xff]
    %v55 = vld [vmem:[#allocation2] sm:$0xff]
    %v56 = vld [vmem:[#allocation2 + $0x8] sm:$0xff]
    %vm57 = vcmask 261120
    %v59 = vsel %vm57, %v45, 0
    %v62 = vsel %vm57, %v46, 0
    %64 = vmatprep.subr.mxu0 0.0
    %65 = vmatpush1.msra.mxu0 0.0
    %66 = vmatprep.subr.mxu0 0.0
    %67 = vmatpush1.msra.mxu0 0.0
    %68 = vmatprep.subr.mxu0 0.0
    %69 = vmatpush1.msra.mxu0 0.0
    %70 = vmatprep.subr.mxu0 0.0
    %71 = vmatpush1.msra.mxu0 0.0
    %72 = vmatprep.subr.mxu0 0.0
    %73 = vmatpush1.msra.mxu0 0.0
    %74 = vmatprep.subr.mxu0 0.0
    %75 = vmatpush1.msra.mxu0 0.0
    %76 = vmatprep.subr.mxu0 0.0
    %77 = vmatpush1.msra.mxu0 0.0
    %78 = vmatprep.subr.mxu0 0.0
    %79 = vmatpush1.msra.mxu0 0.0
    %80 = vmatprep.subr.mxu0 0.0
    %81 = vmatpush1.msra.mxu0 0.0
    %82 = vmatprep.subr.mxu0 0.0
    %83 = vmatpush1.msra.mxu0 0.0
    %84 = vmatprep.subr.mxu0 0.0
    %85 = vmatpush1.msra.mxu0 0.0
    %86 = vmatprep.subr.mxu0 0.0
    %87 = vmatpush1.msra.mxu0 0.0
    %88 = vmatprep.subr.mxu0 0.0
    %89 = vmatpush1.msra.mxu0 %v50
    %90 = vmatprep.subr.mxu0 0.0
    %91 = vmatpush1.msra.mxu0 %v49
    %92 = vmatprep.subr.mxu0 0.0
    %93 = vmatpush1.msra.mxu0 %v48
    %94 = vmatprep.subr.mxu0 0.0
    %95 = vmatpush1.msra.mxu0 %v47
    %96 = vmatprep.subr.mxu0 0.0
    %97 = vmatpush2.msra.mxu0 0.0
    %98 = vmatprep.subr.mxu0 0.0
    %99 = vmatpush2.msra.mxu0 0.0
    %100 = vmatprep.subr.mxu0 0.0
    %101 = vmatpush2.msra.mxu0 0.0
    %102 = vmatprep.subr.mxu0 0.0
    %103 = vmatpush2.msra.mxu0 0.0
    %104 = vmatprep.subr.mxu0 0.0
    %105 = vmatpush2.msra.mxu0 0.0
    %106 = vmatprep.subr.mxu0 0.0
    %107 = vmatpush2.msra.mxu0 0.0
    %108 = vmatprep.subr.mxu0 0.0
    %109 = vmatpush2.msra.mxu0 0.0
    %110 = vmatprep.subr.mxu0 0.0
    %111 = vmatpush2.msra.mxu0 0.0
    %112 = vmatprep.subr.mxu0 0.0
    %113 = vmatpush2.msra.mxu0 0.0
    %114 = vmatprep.subr.mxu0 0.0
    %115 = vmatpush2.msra.mxu0 0.0
    %116 = vmatprep.subr.mxu0 0.0
    %117 = vmatpush2.msra.mxu0 0.0
    %118 = vmatprep.subr.mxu0 0.0
    %119 = vmatpush2.msra.mxu0 0.0
    %120 = vmatprep.subr.mxu0 0.0
    %121 = vmatpush2.msra.mxu0 0.0
    %122 = vmatprep.subr.mxu0 0.0
    %123 = vmatpush2.msra.mxu0 0.0
    %124 = vmatprep.subr.mxu0 0.0
    %125 = vmatpush2.msra.mxu0 0.0
    %126 = vmatprep.subr.mxu0 0.0
    %127 = vmatpush2.msra.mxu0 0.0
    %128 = vmatprep.mubr.f32.mxu0 0.0
    %129 = vmatmul.mubr.f32.gmra.mxu0 %v59
    %v130 = vpop.f32.mrf.mxu0
    %v131 = vadd.f32 0.0, %v130
    %v132 = vpop.f32.mrf.mxu0
    %133 = vmatprep.mubr.f32.mxu0 0.0
    %134 = vmatmul.mubr.f32.gmra.mxu0 %v62
    %v135 = vpop.f32.mrf.mxu0
    %v136 = vadd.f32 0.0, %v135
    %v137 = vpop.f32.mrf.mxu0
    %138 = vdwg.mxu0
    %v139 = vadd.f32 %v55, %v131
    %v140 = vadd.f32 %v56, %v136
    %vm141 = vcmask 392192
    %142 = vst.msk [vmem:[#allocation2] sm:$0xff] %vm141, %v139
    %143 = vst.msk [vmem:[#allocation2 + $0x8] sm:$0xff] %vm141, %v140
    %v144 = vld [vmem:[#allocation3] sm:$0xff]
    %v145 = vld [vmem:[#allocation3 + $0x8] sm:$0xff]
    %146 = vmatprep.subr.mxu0 0.0
    %147 = vmatpush1.msra.mxu0 0.0
    %148 = vmatprep.subr.mxu0 0.0
    %149 = vmatpush1.msra.mxu0 0.0
    %150 = vmatprep.subr.mxu0 0.0
    %151 = vmatpush1.msra.mxu0 0.0
    %152 = vmatprep.subr.mxu0 0.0
    %153 = vmatpush1.msra.mxu0 0.0
    %154 = vmatprep.subr.mxu0 0.0
    %155 = vmatpush1.msra.mxu0 0.0
    %156 = vmatprep.subr.mxu0 0.0
    %157 = vmatpush1.msra.mxu0 0.0
    %158 = vmatprep.subr.mxu0 0.0
    %159 = vmatpush1.msra.mxu0 0.0
    %160 = vmatprep.subr.mxu0 0.0
    %161 = vmatpush1.msra.mxu0 0.0
    %162 = vmatprep.subr.mxu0 0.0
    %163 = vmatpush1.msra.mxu0 0.0
    %164 = vmatprep.subr.mxu0 0.0
    %165 = vmatpush1.msra.mxu0 0.0
    %166 = vmatprep.subr.mxu0 0.0
    %167 = vmatpush1.msra.mxu0 0.0
    %168 = vmatprep.subr.mxu0 0.0
    %169 = vmatpush1.msra.mxu0 0.0
    %170 = vmatprep.subr.mxu0 0.0
    %171 = vmatpush1.msra.mxu0 %v54
    %172 = vmatprep.subr.mxu0 0.0
    %173 = vmatpush1.msra.mxu0 %v53
    %174 = vmatprep.subr.mxu0 0.0
    %175 = vmatpush1.msra.mxu0 %v52
    %176 = vmatprep.subr.mxu0 0.0
    %177 = vmatpush1.msra.mxu0 %v51
    %178 = vmatprep.subr.mxu0 0.0
    %179 = vmatpush2.msra.mxu0 0.0
    %180 = vmatprep.subr.mxu0 0.0
    %181 = vmatpush2.msra.mxu0 0.0
    %182 = vmatprep.subr.mxu0 0.0
    %183 = vmatpush2.msra.mxu0 0.0
    %184 = vmatprep.subr.mxu0 0.0
    %185 = vmatpush2.msra.mxu0 0.0
    %186 = vmatprep.subr.mxu0 0.0
    %187 = vmatpush2.msra.mxu0 0.0
    %188 = vmatprep.subr.mxu0 0.0
    %189 = vmatpush2.msra.mxu0 0.0
    %190 = vmatprep.subr.mxu0 0.0
    %191 = vmatpush2.msra.mxu0 0.0
    %192 = vmatprep.subr.mxu0 0.0
    %193 = vmatpush2.msra.mxu0 0.0
    %194 = vmatprep.subr.mxu0 0.0
    %195 = vmatpush2.msra.mxu0 0.0
    %196 = vmatprep.subr.mxu0 0.0
    %197 = vmatpush2.msra.mxu0 0.0
    %198 = vmatprep.subr.mxu0 0.0
    %199 = vmatpush2.msra.mxu0 0.0
    %200 = vmatprep.subr.mxu0 0.0
    %201 = vmatpush2.msra.mxu0 0.0
    %202 = vmatprep.subr.mxu0 0.0
    %203 = vmatpush2.msra.mxu0 0.0
    %204 = vmatprep.subr.mxu0 0.0
    %205 = vmatpush2.msra.mxu0 0.0
    %206 = vmatprep.subr.mxu0 0.0
    %207 = vmatpush2.msra.mxu0 0.0
    %208 = vmatprep.subr.mxu0 0.0
    %209 = vmatpush2.msra.mxu0 0.0
    %210 = vmatprep.mubr.f32.mxu0 0.0
    %211 = vmatmul.mubr.f32.gmra.mxu0 %v59
    %v212 = vpop.f32.mrf.mxu0
    %v213 = vadd.f32 0.0, %v212
    %v214 = vpop.f32.mrf.mxu0
    %215 = vmatprep.mubr.f32.mxu0 0.0
    %216 = vmatmul.mubr.f32.gmra.mxu0 %v62
    %v217 = vpop.f32.mrf.mxu0
    %v218 = vadd.f32 0.0, %v217
    %v219 = vpop.f32.mrf.mxu0
    %220 = vdwg.mxu0
    %v221 = vadd.f32 %v144, %v213
    %v222 = vadd.f32 %v145, %v218
    %vm223 = vcmask 130048
    %224 = vst.msk [vmem:[#allocation3] sm:$0xff] %vm223, %v221
    %225 = vst.msk [vmem:[#allocation3 + $0x8] sm:$0xff] %vm223, %v222
    // Predicated region
    $region30: #{tpu_custom_call.1} parent=1 // pred_check
      %p226 = pneg %p35
    $region31: #{tpu_custom_call.1} parent=1 // pred_check_branch
      %228 = sbr.rel (%p226) target = $region33
    $region32: #{tpu_custom_call.1} parent=1 // pred_region
      %v229 = vld [vmem:[#allocation4] sm:$0xff]
      %v230 = vld [vmem:[#allocation4 + $0x8] sm:$0xff]
      %v231 = vld [vmem:[#allocation3] sm:$0xff]
      %v232 = vld [vmem:[#allocation3 + $0x8] sm:$0xff]
      %v234 = vsel %vm223, %v231, 0
      %v237 = vsel %vm223, %v232, 0
      %239 = vmatprep.subr.mxu0 0.0
      %240 = vmatpush1.msra.mxu0 0.0
      %241 = vmatprep.subr.mxu0 0.0
      %242 = vmatpush1.msra.mxu0 0.0
      %243 = vmatprep.subr.mxu0 0.0
      %244 = vmatpush1.msra.mxu0 0.0
      %245 = vmatprep.subr.mxu0 0.0
      %246 = vmatpush1.msra.mxu0 0.0
      %247 = vmatprep.subr.mxu0 0.0
      %248 = vmatpush1.msra.mxu0 0.0
      %249 = vmatprep.subr.mxu0 0.0
      %250 = vmatpush1.msra.mxu0 0.0
      %251 = vmatprep.subr.mxu0 0.0
      %252 = vmatpush1.msra.mxu0 0.0
      %253 = vmatprep.subr.mxu0 0.0
      %254 = vmatpush1.msra.mxu0 0.0
      %255 = vmatprep.subr.mxu0 0.0
      %256 = vmatpush1.msra.mxu0 0.0
      %257 = vmatprep.subr.mxu0 0.0
      %258 = vmatpush1.msra.mxu0 0.0
      %259 = vmatprep.subr.mxu0 0.0
      %260 = vmatpush1.msra.mxu0 0.0
      %261 = vmatprep.subr.mxu0 0.0
      %262 = vmatpush1.msra.mxu0 0.0
      %263 = vmatprep.subr.mxu0 0.0
      %264 = vmatpush1.msra.mxu0 0.0
      %265 = vmatprep.subr.mxu0 0.0
      %266 = vmatpush1.msra.mxu0 0.0
      %267 = vmatprep.subr.mxu0 0.0
      %268 = vmatpush1.msra.mxu0 %v230
      %269 = vmatprep.subr.mxu0 0.0
      %270 = vmatpush1.msra.mxu0 %v229
      %271 = vmatprep.subr.mxu0 0.0
      %272 = vmatpush2.msra.mxu0 0.0
      %273 = vmatprep.subr.mxu0 0.0
      %274 = vmatpush2.msra.mxu0 0.0
      %275 = vmatprep.subr.mxu0 0.0
      %276 = vmatpush2.msra.mxu0 0.0
      %277 = vmatprep.subr.mxu0 0.0
      %278 = vmatpush2.msra.mxu0 0.0
      %279 = vmatprep.subr.mxu0 0.0
      %280 = vmatpush2.msra.mxu0 0.0
      %281 = vmatprep.subr.mxu0 0.0
      %282 = vmatpush2.msra.mxu0 0.0
      %283 = vmatprep.subr.mxu0 0.0
      %284 = vmatpush2.msra.mxu0 0.0
      %285 = vmatprep.subr.mxu0 0.0
      %286 = vmatpush2.msra.mxu0 0.0
      %287 = vmatprep.subr.mxu0 0.0
      %288 = vmatpush2.msra.mxu0 0.0
      %289 = vmatprep.subr.mxu0 0.0
      %290 = vmatpush2.msra.mxu0 0.0
      %291 = vmatprep.subr.mxu0 0.0
      %292 = vmatpush2.msra.mxu0 0.0
      %293 = vmatprep.subr.mxu0 0.0
      %294 = vmatpush2.msra.mxu0 0.0
      %295 = vmatprep.subr.mxu0 0.0
      %296 = vmatpush2.msra.mxu0 0.0
      %297 = vmatprep.subr.mxu0 0.0
      %298 = vmatpush2.msra.mxu0 0.0
      %299 = vmatprep.subr.mxu0 0.0
      %300 = vmatpush2.msra.mxu0 0.0
      %301 = vmatprep.subr.mxu0 0.0
      %302 = vmatpush2.msra.mxu0 0.0
      %303 = vmatprep.mubr.f32.mxu0 0.0
      %304 = vmatmul.mubr.f32.gmra.mxu0 %v234
      %v305 = vpop.f32.mrf.mxu0
      %v306 = vadd.f32 0.0, %v305
      %v307 = vpop.f32.mrf.mxu0
      %308 = vmatprep.mubr.f32.mxu0 0.0
      %309 = vmatmul.mubr.f32.gmra.mxu0 %v237
      %v310 = vpop.f32.mrf.mxu0
      %v311 = vadd.f32 0.0, %v310
      %v312 = vpop.f32.mrf.mxu0
      %313 = vdwg.mxu0
      %v314 = vld [vmem:[#allocation2] sm:$0xff]
      %v315 = vld [vmem:[#allocation2 + $0x8] sm:$0xff]
      %v316 = vadd.f32 %v314, %v306
      %v317 = vadd.f32 %v315, %v311
      %v318 = vld [vmem:[%s2] sm:$0x1]
      %v320 = vlaneseq
      %v321 = vshrl.u32 %v320, 7
      %v322 = vsub.s32 0, %v321
      %v323 = vrot.slane %v318, %v322
      %v325 = vadd.f32 %v316, %v323
      %v326 = vadd.f32 %v317, %v323
      %327 = vst.msk [vmem:[#allocation7] sm:$0xff] %vm141, %v325
      %328 = vst.msk [vmem:[#allocation7 + $0x8] sm:$0xff] %vm141, %v326
    $region33: #{tpu_custom_call.1} parent=1 // pred_fallthru
      _
    // Predicated region
    $region34: #{tpu_custom_call.1} parent=1 // pred_check
      _
    $region35: #{tpu_custom_call.1} parent=1 // pred_check_branch
      %330 = sbr.rel (0) target = $region37
    $region36: #{tpu_custom_call.1} parent=1 // pred_region
      %s332 = ssub.s32 256, 256
      %333 = vsyncadd [#allocation6], %s332
      %s334 = sshll.u32 [#allocation7], 4
      %s335 = int_to_ptr.vmem [resolvable:$true] %s334
      %340 = dma.vmem_to_hbm [thread:$0]  %s335, 256, %s5, [#allocation6], 128, 128, 8
    $region37: #{tpu_custom_call.1} parent=1 // pred_fallthru
      _
    // Predicated region
    $region38: #{tpu_custom_call.1} parent=1 // pred_check
      _
    $region39: #{tpu_custom_call.1} parent=1 // pred_check_branch
      %342 = sbr.rel (0) target = $region41
    $region40: #{tpu_custom_call.1} parent=1 // pred_region
      %343 = dma.done [#allocation6], 256
    $region41: #{tpu_custom_call.1} parent=1 // pred_fallthru
      _
    %344 = vsyncpa [#allocation5], 1
    %345 = vsyncpa [#allocation6], 1

</llo_original>
